<compile_context>
chip_gen: v5e
topology: v5e:2x2
jax: 0.10.0
libtpu: 0.0.40
codegen_flags: <defaults>
</compile_context>

<pallas_src>
from functools import partial

import numpy as np
import jax
import jax.numpy as jnp
from jax.experimental import pallas as pl
from jax.experimental.pallas import tpu as pltpu


# ----------------------------------------------------------------------------
# Fused kernel: 1x1-conv predictor + sigmoid + whole-block box decode
# ----------------------------------------------------------------------------
def make_fused_kernel(stride, feat_w, tile, A):
    stride = float(stride)
    feat_w_f = float(feat_w)
    inv_w = 1.0 / feat_w_f

    def kernel(x_ref, w_ref, b_ref, anch_ref, box_ref, sc_ref):
        # x_ref   : (C, tile)         f32   feature block (lane = positions)
        # w_ref   : (A*no, C)         bf16  row-permuted predictor weights
        # b_ref   : (A*no, 1)         f32   row-permuted bias
        # anch_ref: (2A, 1)           f32   [2*aw_0..2*aw_{A-1}, 2*ah_0..]
        # box_ref : (4A, tile)        f32   rows [x1(A), y1(A), x2(A), y2(A)]
        # sc_ref  : (A*(1+nc), tile)  bf16  rows [obj(A), cls per anchor(A*nc)]
        j = pl.program_id(1)

        xb = x_ref[...].astype(jnp.bfloat16)                 # cast in-kernel
        acc = jnp.dot(w_ref[...], xb, preferred_element_type=jnp.float32)
        p = jax.nn.sigmoid(acc + b_ref[...])                 # (A*no, tile) f32

        # grid coords, once per tile; recip-mul + floor (no int division).
        idx = (j * tile
               + jax.lax.broadcasted_iota(jnp.int32, (1, tile), 1)
               ).astype(jnp.float32)
        gy = jnp.floor((idx + 0.5) * inv_w)
        gx = idx - gy * feat_w_f
        g_xy = jnp.concatenate([jnp.broadcast_to(gx, (A, tile)),
                                jnp.broadcast_to(gy, (A, tile))], axis=0)

        # whole-block cxcywh -> xyxy decode on (2A, tile) blocks.
        c_xy = (2.0 * p[0:2 * A, :] - 0.5 + g_xy) * stride   # centres
        p_wh = p[2 * A:4 * A, :]
        half_wh = anch_ref[...] * (p_wh * p_wh)              # 2*anchor*p^2 = wh/2
        box_ref[...] = jnp.concatenate(
            [c_xy - half_wh, c_xy + half_wh], axis=0)        # (4A, tile)

        # obj + per-class probabilities in bf16 (one contiguous slice of p);
        # obj*cls is formed post-filter on the candidate rows, exactly as the
        # PyTorch reference does.
        sc_ref[...] = p[4 * A:, :].astype(jnp.bfloat16)

    return kernel


def _pick_tile(hw_pad, n, c, a, nc, vmem_budget=12 * 1024 * 1024):
    """Largest lane-dense tile whose double-buffered working set fits every
    generation's default scoped VMEM (v5e: 16 MiB), capped at 2048 for v7x,
    with >= 2 grid steps where possible (dual-TC v7x)."""
    buf_bytes_per_pos = c * 4 + 4 * a * 4 + a * (1 + nc) * 2   # x + boxes + scores
    tmp_bytes_per_pos = a * (5 + nc) * 4                       # sigmoid temp
    tile = 128
    for t in (2048, 1024, 512, 256, 128):
        if hw_pad % t == 0 and \
                (2 * buf_bytes_per_pos + tmp_bytes_per_pos) * t <= vmem_budget:
            tile = t
            break
    while n * (hw_pad // tile) < 2 and tile > 128:
        tile //= 2
    return tile


@partial(jax.jit, static_argnames=("stride", "nc", "anchors_wh"))
def fused_head_level(x_nchw, w, b, *, stride, nc, anchors_wh):
    """One feature level.  Returns row-major (n, pos, anchor) tensors:
       boxes (M,4) f32, obj (M,) bf16, class probs (M,nc) bf16, M = N*H*W*A."""
    N, C, H, Wf = x_nchw.shape
    A = len(anchors_wh)
    no = 5 + nc
    HW = H * Wf
    HW_pad = ((HW + 127) // 128) * 128                  # lane-dense outputs
    tile = _pick_tile(HW_pad, N, C, A, nc)

    x = x_nchw.reshape(N, C, HW)
    if HW_pad != HW:
        x = jnp.pad(x, ((0, 0), (0, 0), (0, HW_pad - HW)))

    # Permute predictor rows so the matmul output is already grouped
    # [x(A), y(A), w(A), h(A), obj(A), cls grouped per anchor (A*nc)].
    perm = ([a * no + k for k in range(4) for a in range(A)]
            + [a * no + 4 for a in range(A)]
            + [a * no + 5 + c for a in range(A) for c in range(nc)])
    perm = np.asarray(perm, np.int32)
    w_t = jnp.transpose(w)[perm].astype(jnp.bfloat16)          # (A*no, C)
    b_col = b[perm].reshape(A * no, 1).astype(jnp.float32)
    anch2 = jnp.asarray(
        np.array([2.0 * aw for (aw, _) in anchors_wh]
                 + [2.0 * ah for (_, ah) in anchors_wh],
                 dtype=np.float32).reshape(2 * A, 1))

    kernel = make_fused_kernel(stride, Wf, tile, A)
    cost = pl.CostEstimate(
        flops=2 * N * HW_pad * C * (A * no),
        transcendentals=N * HW_pad * A * no,
        bytes_accessed=(N * C * HW_pad * 4 + A * no * C * 2 + A * no * 4
                        + N * 4 * A * HW_pad * 4
                        + N * A * (1 + nc) * HW_pad * 2),
    )

    boxes, scores = pl.pallas_call(
        kernel,
        out_shape=(
            jax.ShapeDtypeStruct((N, 4 * A, HW_pad), jnp.float32),
            jax.ShapeDtypeStruct((N, A * (1 + nc), HW_pad), jnp.bfloat16),
        ),
        grid=(N, HW_pad // tile),
        in_specs=[
            pl.BlockSpec((None, C, tile), lambda n, j: (n, 0, j)),
            pl.BlockSpec((A * no, C), lambda n, j: (0, 0)),
            pl.BlockSpec((A * no, 1), lambda n, j: (0, 0)),
            pl.BlockSpec((2 * A, 1), lambda n, j: (0, 0)),
        ],
        out_specs=[
            pl.BlockSpec((None, 4 * A, tile), lambda n, j: (n, 0, j)),
            pl.BlockSpec((None, A * (1 + nc), tile), lambda n, j: (n, 0, j)),
        ],
        compiler_params=pltpu.CompilerParams(
            dimension_semantics=("parallel", "parallel")),
        cost_estimate=cost,
    )(x, w_t, b_col, anch2)

    # On-device layout glue: trim lane padding, reorder to (n, pos, anchor).
    boxes = (boxes[:, :, :HW].reshape(N, 4, A, HW)
             .transpose(0, 3, 2, 1).reshape(-1, 4))
    obj = scores[:, :A, :HW].transpose(0, 2, 1).reshape(-1)
    cls_p = (scores[:, A:, :HW].reshape(N, A, nc, HW)
             .transpose(0, 3, 1, 2).reshape(-1, nc))
    # TODO(synk): a device-side score-threshold / top-K compaction would cut
    # the dense PCIe transfer further; dynamic-shape gather stays on the host.
    return boxes, obj, cls_p


# ----------------------------------------------------------------------------
# Host-side post-processing (dynamic shapes; no Pallas equivalent)
# ----------------------------------------------------------------------------
def nms_numpy(boxes, scores, thresh):
    # TODO(synk): torchvision.ops.nms has no Pallas equivalent; greedy IoU NMS on host.
    x1, y1, x2, y2 = boxes.T
    areas = (x2 - x1) * (y2 - y1)
    order = scores.argsort()[::-1]
    keep = []
    while order.size > 0:
        i = order[0]
        keep.append(i)
        rest = order[1:]
        xx1 = np.maximum(x1[i], x1[rest])
        yy1 = np.maximum(y1[i], y1[rest])
        xx2 = np.minimum(x2[i], x2[rest])
        yy2 = np.minimum(y2[i], y2[rest])
        inter = np.maximum(0.0, xx2 - xx1) * np.maximum(0.0, yy2 - yy1)
        iou = inter / (areas[i] + areas[rest] - inter + 1e-12)
        order = rest[iou <= thresh]
    return np.asarray(keep, dtype=np.int64)


def head_postprocess(boxes, obj, cls_probs, ids, image_shapes, scale_factors,
                     max_size, score_thresh, nms_thresh, detections):
    # TODO(synk): torch.where-based dynamic filtering has no Pallas equivalent; done on host.
    m0 = obj > score_thresh
    boxes, cls_probs, ids, obj = boxes[m0], cls_probs[m0], ids[m0], obj[m0]
    logits = obj[:, None] * cls_probs          # ps[:, [4]] * ps[:, 5:]
    rows, labels = np.where(logits > score_thresh)
    ids, boxes, scr = ids[rows], boxes[rows], logits[rows, labels]
    results = []
    for i, im_s in enumerate(image_shapes):
        keep = np.where(ids == i)[0]
        box, label, score = boxes[keep].copy(), labels[keep], scr[keep]
        if len(box) > 0:
            box[:, 0] = np.clip(box[:, 0], 0, im_s[1])
            box[:, 1] = np.clip(box[:, 1], 0, im_s[0])
            box[:, 2] = np.clip(box[:, 2], 0, im_s[1])
            box[:, 3] = np.clip(box[:, 3], 0, im_s[0])
            offsets = label.astype(box.dtype) * max_size
            keep2 = nms_numpy(box + offsets[:, None], score, nms_thresh)[:detections]
            box, label, score = box[keep2] / scale_factors[i], label[keep2], score[keep2]
        results.append(dict(boxes=box, labels=label, scores=score))
    return results


# ----------------------------------------------------------------------------
# Full Head forward (eval mode): fused predictor+decode -> host post-process
# ----------------------------------------------------------------------------
def head_forward(features, params, anchors, strides, num_classes,
                 image_shapes, scale_factors, max_size,
                 score_thresh, nms_thresh, detections):
    anchors_np = np.asarray(anchors)

    # Dispatch every level first (async) so the device never idles between
    # levels; host transfer / numpy conversion happens afterwards.
    dev_outs, meta = [], []
    for feat, (w, b), anch, stride in zip(features, params, anchors_np, strides):
        N, _, H, Wf = feat.shape
        A = anch.shape[0]
        anchors_wh = tuple((float(x[0]), float(x[1])) for x in anch)
        dev_outs.append(fused_head_level(
            feat, w, b, stride=float(stride), nc=num_classes,
            anchors_wh=anchors_wh))
        meta.append((N, H * Wf, A))

    boxes_l, obj_l, cls_l, ids_l = [], [], [], []
    for (box_d, obj_d, cls_d), (N, HW, A) in zip(dev_outs, meta):
        boxes_l.append(np.asarray(box_d))
        obj_l.append(np.asarray(obj_d).astype(np.float32))
        cls_l.append(np.asarray(cls_d).astype(np.float32))
        ids_l.append(np.repeat(np.arange(N), HW * A))

    boxes = np.concatenate(boxes_l, axis=0)
    obj = np.concatenate(obj_l, axis=0)
    cls_probs = np.concatenate(cls_l, axis=0)
    ids = np.concatenate(ids_l, axis=0)

    results = head_postprocess(boxes, obj, cls_probs, ids, image_shapes,
                               scale_factors, max_size, score_thresh,
                               nms_thresh, detections)
    losses = {}  # TODO(synk): training-mode compute_loss not exercised (eval path only).
    return results, losses


# ----------------------------------------------------------------------------
# Dense f32 reference (numpy) for correctness checking
# ----------------------------------------------------------------------------
def _reference_level_np(feat, w, b, stride, nc, anchors):
    feat = np.asarray(feat, np.float32)
    w = np.asarray(w, np.float32)
    b = np.asarray(b, np.float32)
    anchors = np.asarray(anchors, np.float32)
    N, C, H, Wf = feat.shape
    A = anchors.shape[0]
    no = 5 + nc
    HW = H * Wf
    logits = np.einsum('kc,ncp->nkp', w.T, feat.reshape(N, C, HW)) \
        + b[None, :, None]
    p = 1.0 / (1.0 + np.exp(-logits))
    p = p.reshape(N, A, no, HW).transpose(0, 3, 1, 2)           # (N, HW, A, no)
    gx = (np.arange(HW) % Wf).astype(np.float32)[None, :, None]
    gy = (np.arange(HW) // Wf).astype(np.float32)[None, :, None]
    cx = (2.0 * p[..., 0] - 0.5 + gx) * stride
    cy = (2.0 * p[..., 1] - 0.5 + gy) * stride
    bw = 4.0 * p[..., 2] ** 2 * anchors[None, None, :, 0]
    bh = 4.0 * p[..., 3] ** 2 * anchors[None, None, :, 1]
    boxes = np.stack([cx - bw / 2, cy - bh / 2, cx + bw / 2, cy + bh / 2],
                     axis=-1)
    return boxes.reshape(-1, 4), p[..., 4].reshape(-1), p[..., 5:].reshape(-1, nc)


if __name__ == "__main__":
    key = jax.random.PRNGKey(0)

    N, C, num_classes, A = 2, 16, 3, 3
    no = 5 + num_classes
    spatials = [8, 4]
    strides = [8, 16]
    anchors = jnp.array(
        [[[2.5, 3.25], [4.0, 7.5], [8.25, 5.75]],
         [[7.5, 15.25], [15.5, 11.25], [14.75, 29.75]]], dtype=jnp.float32)

    score_thresh, nms_thresh, detections = 0.2, 0.5, 100
    image_shapes = [(64, 64), (64, 64)]
    scale_factors = [1.0, 1.0]
    max_size = 64

    keys = jax.random.split(key, 2 * len(spatials))
    features, params = [], []
    for li, s in enumerate(spatials):
        features.append(
            jax.random.normal(keys[2 * li], (N, C, s, s), dtype=jnp.float32))
        w = 0.1 * jax.random.normal(keys[2 * li + 1], (C, A * no),
                                    dtype=jnp.float32)
        b = jnp.zeros((A * no,), dtype=jnp.float32)
        params.append((w, b))

    # --- kernel vs dense f32 reference (per level) --------------------------
    anchors_np = np.asarray(anchors)
    for feat, (w, b), anch, stride in zip(features, params, anchors_np, strides):
        anchors_wh = tuple((float(x[0]), float(x[1])) for x in anch)
        box_d, obj_d, cls_d = jax.block_until_ready(fused_head_level(
            feat, w, b, stride=float(stride), nc=num_classes,
            anchors_wh=anchors_wh))
        box_r, obj_r, cls_r = _reference_level_np(
            feat, w, b, float(stride), num_classes, anch)
        np.testing.assert_allclose(np.asarray(box_d), box_r,
                                   atol=1.0, rtol=0.05)
        np.testing.assert_allclose(np.asarray(obj_d).astype(np.float32),
                                   obj_r, atol=0.03)
        np.testing.assert_allclose(np.asarray(cls_d).astype(np.float32),
                                   cls_r, atol=0.03)

    # --- full Head.forward (eval path) --------------------------------------
    results, losses = head_forward(
        features, params, anchors, strides, num_classes,
        image_shapes, scale_factors, max_size,
        score_thresh, nms_thresh, detections)

    for r in results:
        assert r["boxes"].shape[0] == r["labels"].shape[0] == r["scores"].shape[0]
        assert r["boxes"].ndim == 2 and (
            r["boxes"].shape[0] == 0 or r["boxes"].shape[1] == 4)
        assert np.all(np.isfinite(r["boxes"]))

    print("KERNEL_OK")
</pallas_src>

<mosaic_0001>
module attributes {stable_mosaic.version = 11 : i64} {
  func.func @kernel(%arg0: i32, %arg1: i32, %arg2: memref<1x16x128xf32, #tpu.memory_space<vmem>>, %arg3: memref<24x16xbf16, #tpu.memory_space<vmem>>, %arg4: memref<24x1xf32, #tpu.memory_space<vmem>>, %arg5: memref<6x1xf32, #tpu.memory_space<vmem>>, %arg6: memref<1x12x128xf32, #tpu.memory_space<vmem>>, %arg7: memref<1x12x128xbf16, #tpu.memory_space<vmem>>) attributes {dimension_semantics = [#tpu.dimension_semantics<parallel>, #tpu.dimension_semantics<parallel>], iteration_bounds = array<i64: 2, 1>, scalar_prefetch = 0 : i64, scratch_operands = 0 : i64, tpu.core_type = #tpu.core_type<tc>, window_params = [{transform_indices = @transform_0, window_bounds = array<i64: 1, 16, 128>}, {pipeline_mode = #tpu.pipeline_mode<synchronous>, transform_indices = @transform_1, window_bounds = array<i64: 24, 16>}, {pipeline_mode = #tpu.pipeline_mode<synchronous>, transform_indices = @transform_2, window_bounds = array<i64: 24, 1>}, {pipeline_mode = #tpu.pipeline_mode<synchronous>, transform_indices = @transform_3, window_bounds = array<i64: 6, 1>}, {transform_indices = @transform_4, window_bounds = array<i64: 1, 12, 128>}, {transform_indices = @transform_5, window_bounds = array<i64: 1, 12, 128>}]} {
    %c0 = arith.constant 0 : index
    %c0_0 = arith.constant 0 : index
    %c0_1 = arith.constant 0 : index
    %0 = vector.load %arg2[%c0, %c0_0, %c0_1] : memref<1x16x128xf32, #tpu.memory_space<vmem>>, vector<1x16x128xf32>
    %1 = vector.shape_cast %0 : vector<1x16x128xf32> to vector<16x128xf32>
    %2 = arith.truncf %1 : vector<16x128xf32> to vector<16x128xbf16>
    %c0_2 = arith.constant 0 : index
    %c0_3 = arith.constant 0 : index
    %3 = vector.load %arg3[%c0_2, %c0_3] : memref<24x16xbf16, #tpu.memory_space<vmem>>, vector<24x16xbf16>
    %cst = arith.constant dense<0.000000e+00> : vector<24x128xf32>
    %4 = tpu.matmul %3, %2, %cst {dimension_numbers = #tpu.dot_dimension_numbers<[1], [0], [0], [1], [0, 0, 1, 1], [], []>} : vector<24x16xbf16>, vector<16x128xbf16>, vector<24x128xf32> -> vector<24x128xf32>
    %c0_4 = arith.constant 0 : index
    %c0_5 = arith.constant 0 : index
    %5 = vector.load %arg4[%c0_4, %c0_5] : memref<24x1xf32, #tpu.memory_space<vmem>>, vector<24x1xf32>
    %6 = vector.broadcast %5 : vector<24x1xf32> to vector<24x128xf32>
    %7 = arith.addf %4, %6 : vector<24x128xf32>
    %8 = arith.negf %7 : vector<24x128xf32>
    %9 = math.exp %8 : vector<24x128xf32>
    %cst_6 = arith.constant 1.000000e+00 : f32
    %10 = vector.broadcast %cst_6 : f32 to vector<24x128xf32>
    %11 = arith.addf %10, %9 : vector<24x128xf32>
    %12 = arith.divf %10, %11 : vector<24x128xf32>
    %c128_i32 = arith.constant 128 : i32
    %13 = arith.muli %arg1, %c128_i32 : i32
    %14 = tpu.iota {dimensions = array<i32: 1>} : vector<1x128xi32>
    %15 = vector.broadcast %13 : i32 to vector<1x128xi32>
    %16 = arith.addi %15, %14 : vector<1x128xi32>
    %17 = arith.sitofp %16 : vector<1x128xi32> to vector<1x128xf32>
    %cst_7 = arith.constant 5.000000e-01 : f32
    %18 = vector.broadcast %cst_7 : f32 to vector<1x128xf32>
    %19 = arith.addf %17, %18 : vector<1x128xf32>
    %cst_8 = arith.constant 1.250000e-01 : f32
    %20 = vector.broadcast %cst_8 : f32 to vector<1x128xf32>
    %21 = arith.mulf %19, %20 : vector<1x128xf32>
    %22 = math.floor %21 : vector<1x128xf32>
    %cst_9 = arith.constant 8.000000e+00 : f32
    %23 = vector.broadcast %cst_9 : f32 to vector<1x128xf32>
    %24 = arith.mulf %22, %23 : vector<1x128xf32>
    %25 = arith.subf %17, %24 : vector<1x128xf32>
    %26 = vector.shape_cast %25 : vector<1x128xf32> to vector<1x128xf32>
    %27 = vector.broadcast %26 : vector<1x128xf32> to vector<3x128xf32>
    %28 = vector.shape_cast %22 : vector<1x128xf32> to vector<1x128xf32>
    %29 = vector.broadcast %28 : vector<1x128xf32> to vector<3x128xf32>
    %30 = tpu.concatenate %27, %29 in 0 : vector<3x128xf32>, vector<3x128xf32> -> vector<6x128xf32>
    %31 = vector.extract_strided_slice %12 {offsets = [0, 0], sizes = [6, 128], strides = [1, 1]} : vector<24x128xf32> to vector<6x128xf32>
    %cst_10 = arith.constant 2.000000e+00 : f32
    %32 = vector.broadcast %cst_10 : f32 to vector<6x128xf32>
    %33 = arith.mulf %32, %31 : vector<6x128xf32>
    %cst_11 = arith.constant 5.000000e-01 : f32
    %34 = vector.broadcast %cst_11 : f32 to vector<6x128xf32>
    %35 = arith.subf %33, %34 : vector<6x128xf32>
    %36 = arith.addf %35, %30 : vector<6x128xf32>
    %cst_12 = arith.constant 8.000000e+00 : f32
    %37 = vector.broadcast %cst_12 : f32 to vector<6x128xf32>
    %38 = arith.mulf %36, %37 : vector<6x128xf32>
    %39 = vector.extract_strided_slice %12 {offsets = [6, 0], sizes = [6, 128], strides = [1, 1]} : vector<24x128xf32> to vector<6x128xf32>
    %c0_13 = arith.constant 0 : index
    %c0_14 = arith.constant 0 : index
    %40 = vector.load %arg5[%c0_13, %c0_14] : memref<6x1xf32, #tpu.memory_space<vmem>>, vector<6x1xf32>
    %41 = arith.mulf %39, %39 : vector<6x128xf32>
    %42 = vector.broadcast %40 : vector<6x1xf32> to vector<6x128xf32>
    %43 = arith.mulf %42, %41 : vector<6x128xf32>
    %44 = arith.subf %38, %43 : vector<6x128xf32>
    %45 = arith.addf %38, %43 : vector<6x128xf32>
    %46 = tpu.concatenate %44, %45 in 0 : vector<6x128xf32>, vector<6x128xf32> -> vector<12x128xf32>
    %c0_15 = arith.constant 0 : index
    %c0_16 = arith.constant 0 : index
    %c0_17 = arith.constant 0 : index
    %47 = vector.load %arg6[%c0_15, %c0_16, %c0_17] : memref<1x12x128xf32, #tpu.memory_space<vmem>>, vector<1x12x128xf32>
    %48 = vector.shape_cast %47 : vector<1x12x128xf32> to vector<12x128xf32>
    %49 = vector.shape_cast %46 : vector<12x128xf32> to vector<1x12x128xf32>
    tpu.vector_store %arg6[%c0_15, %c0_16, %c0_17], %49 {strides = array<i32>} : memref<1x12x128xf32, #tpu.memory_space<vmem>>, vector<1x12x128xf32>,
    %50 = vector.extract_strided_slice %12 {offsets = [12, 0], sizes = [12, 128], strides = [1, 1]} : vector<24x128xf32> to vector<12x128xf32>
    %51 = arith.truncf %50 : vector<12x128xf32> to vector<12x128xbf16>
    %c0_18 = arith.constant 0 : index
    %c0_19 = arith.constant 0 : index
    %c0_20 = arith.constant 0 : index
    %52 = vector.load %arg7[%c0_18, %c0_19, %c0_20] : memref<1x12x128xbf16, #tpu.memory_space<vmem>>, vector<1x12x128xbf16>
    %53 = vector.shape_cast %52 : vector<1x12x128xbf16> to vector<12x128xbf16>
    %54 = vector.shape_cast %51 : vector<12x128xbf16> to vector<1x12x128xbf16>
    tpu.vector_store %arg7[%c0_18, %c0_19, %c0_20], %54 {strides = array<i32>} : memref<1x12x128xbf16, #tpu.memory_space<vmem>>, vector<1x12x128xbf16>,
    return
  }
  func.func @transform_0(%arg0: i32, %arg1: i32) -> (i32, i32, i32) {
    %c0_i32 = arith.constant 0 : i32
    %c0_i32_0 = arith.constant 0 : i32
    return %arg0, %c0_i32, %arg1 : i32, i32, i32
  }
  func.func @transform_1(%arg0: i32, %arg1: i32) -> (i32, i32) {
    %c0_i32 = arith.constant 0 : i32
    %c0_i32_0 = arith.constant 0 : i32
    %c0_i32_1 = arith.constant 0 : i32
    return %c0_i32, %c0_i32_0 : i32, i32
  }
  func.func @transform_2(%arg0: i32, %arg1: i32) -> (i32, i32) {
    %c0_i32 = arith.constant 0 : i32
    %c0_i32_0 = arith.constant 0 : i32
    %c0_i32_1 = arith.constant 0 : i32
    return %c0_i32, %c0_i32_0 : i32, i32
  }
  func.func @transform_3(%arg0: i32, %arg1: i32) -> (i32, i32) {
    %c0_i32 = arith.constant 0 : i32
    %c0_i32_0 = arith.constant 0 : i32
    %c0_i32_1 = arith.constant 0 : i32
    return %c0_i32, %c0_i32_0 : i32, i32
  }
  func.func @transform_4(%arg0: i32, %arg1: i32) -> (i32, i32, i32) {
    %c0_i32 = arith.constant 0 : i32
    %c0_i32_0 = arith.constant 0 : i32
    return %arg0, %c0_i32, %arg1 : i32, i32, i32
  }
  func.func @transform_5(%arg0: i32, %arg1: i32) -> (i32, i32, i32) {
    %c0_i32 = arith.constant 0 : i32
    %c0_i32_0 = arith.constant 0 : i32
    return %arg0, %c0_i32, %arg1 : i32, i32, i32
  }
}

</mosaic_0001>

<llo_original>
// kernel: fused_head_level.1
$region0: #{fused_head_level.1}
  #allocation0 [shape = 'u32[]', space=smem, size = 0x4, offset = 0x4, fixed_abs, tag = 'smem constant byte address 0x4 - core index']
  #allocation1 [shape = 'u32[72,128]{1,0:T(1,128)}', space=vmem, size = 0x9000, scoped, tag = 'internal scratch']
  %s0 = inlined_call_operand.vmem [shape: f32[2,16,128], index: 0, kind: input, shape index: {}]
  %s1 = inlined_call_operand.vmem [shape: bf16[24,16], index: 1, kind: input, shape index: {}]
  %s2 = inlined_call_operand.vmem [shape: f32[24,1], index: 2, kind: input, shape index: {}]
  %s3 = inlined_call_operand.vmem [shape: f32[6,1], index: 3, kind: input, shape index: {}]
  %s4 = inlined_call_operand.vmem [shape: f32[2,12,128], index: 4, kind: output, shape index: {0}]
  %s5 = inlined_call_operand.vmem [shape: bf16[2,12,128], index: 5, kind: output, shape index: {1}]
  %6 = xla_tuple %s4, %s5
  %s7 = sld [smem:[#allocation0]]
  $region57: #{fused_head_level.1} parent=0
    _
  %s9 = ssub.s32 1, %s7
  %s10 = scalar_select 0, %s9, %s7
  loop: start=0, step=1, limit=4
  $region2: #{fused_head_level.1} parent=0 // loop_pre_header
    _
  $region3: #{fused_head_level.1} parent=0 // loop_header
    %s12 = sphi 0, %s16
    %p13 = scmp.ge.s32.totalorder %s12, 4
    %s19 = sphi 0, %s31
    %s20 = sphi 0, %s27
    %s21 = sphi 0, %s19
    %s22 = sphi 0, %s20
    %s23 = sphi 0, %s21
    %s24 = sphi 0, %s22
    %s36 = sphi 0, %s38
    %s39 = sphi 0, %s36
    %s40 = sphi 0, %s39
    %s56 = sphi 0, %s40
    %s60 = sphi 0, %s60
    %s62 = sphi 0, %s60
    %s63 = sphi 0, %s62
    %s77 = sphi 0, %s63
    %s81 = sphi 0, %s81
    %s83 = sphi 0, %s81
    %s84 = sphi 0, %s83
    %s98 = sphi 0, %s84
    %s102 = sphi 0, %s102
    %s104 = sphi 0, %s102
    %s105 = sphi 0, %s104
    %s119 = sphi 0, %s105
    %s127 = sphi 0, %s129
    %s130 = sphi 0, %s127
    %s131 = sphi 0, %s130
    %s147 = sphi 0, %s131
    %s155 = sphi 0, %s157
    %s158 = sphi 0, %s155
    %s159 = sphi 0, %s158
    %s175 = sphi 0, %s159
  $region4: #{fused_head_level.1} parent=0 // loop_header_branch
    %15 = sbr.rel (%p13) target = $region8
  $region5: #{fused_head_level.1} parent=0 // loop_body
    %s17 = ssub.s32 %s12, 1
    %s18 = ssub.s32 %s12, 2
    %s25 = sadd.s32 1, %s20
    %p26 = scmp.ge.s32.totalorder %s25, 1
    %s27 = scalar_select %p26, 0, %s25
    %s28 = sadd.s32 1, %s19
    %s29 = scalar_select %p26, %s28, %s19
    %p30 = scmp.ge.s32.totalorder %s29, 2
    %s31 = scalar_select %p30, 0, %s29
    %s32 = ssub.s32 %s19, %s31
    %s33 = ssub.s32 %s20, %s27
    %s34 = sor.u32 %s32, %s33
    %p35 = scmp.eq.s32.totalorder %s34, 0
    %s37 = sadd.s32 %s36, 1
    %s38 = scalar_select %p35, %s36, %s37
    %p41 = pneg %p35
    %p42 = scmp.eq.s32.totalorder %s12, 1
    %p43 = por %p41, %p42
    %p44 = scmp.ne.s32.totalorder %s36, %s39
    %p45 = scmp.eq.s32.totalorder %s12, 0
    %p46 = por %p44, %p45
    %p47 = scmp.ne.s32.totalorder %s36, %s39
    %p48 = scmp.eq.s32.totalorder %s17, 1
    %p49 = por %p47, %p48
    %p50 = scmp.ne.s32.totalorder %s39, %s40
    %p51 = scmp.eq.s32.totalorder %s17, 0
    %p52 = por %p50, %p51
    %p53 = scmp.ne.s32.totalorder %s39, %s40
    %p54 = scmp.eq.s32.totalorder %s18, 1
    %p55 = por %p53, %p54
    %p57 = scmp.ne.s32.totalorder %s40, %s56
    %p58 = scmp.eq.s32.totalorder %s18, 0
    %p59 = por %p57, %p58
    %s61 = sadd.s32 %s60, 1
    %p64 = scmp.eq.s32.totalorder %s12, 1
    %p65 = scmp.ne.s32.totalorder %s60, %s62
    %p66 = scmp.eq.s32.totalorder %s12, 0
    %p67 = por %p65, %p66
    %p68 = scmp.ne.s32.totalorder %s60, %s62
    %p69 = scmp.eq.s32.totalorder %s17, 1
    %p70 = por %p68, %p69
    %p71 = scmp.ne.s32.totalorder %s62, %s63
    %p72 = scmp.eq.s32.totalorder %s17, 0
    %p73 = por %p71, %p72
    %p74 = scmp.ne.s32.totalorder %s62, %s63
    %p75 = scmp.eq.s32.totalorder %s18, 1
    %p76 = por %p74, %p75
    %p78 = scmp.ne.s32.totalorder %s63, %s77
    %p79 = scmp.eq.s32.totalorder %s18, 0
    %p80 = por %p78, %p79
    %s82 = sadd.s32 %s81, 1
    %p85 = scmp.eq.s32.totalorder %s12, 1
    %p86 = scmp.ne.s32.totalorder %s81, %s83
    %p87 = scmp.eq.s32.totalorder %s12, 0
    %p88 = por %p86, %p87
    %p89 = scmp.ne.s32.totalorder %s81, %s83
    %p90 = scmp.eq.s32.totalorder %s17, 1
    %p91 = por %p89, %p90
    %p92 = scmp.ne.s32.totalorder %s83, %s84
    %p93 = scmp.eq.s32.totalorder %s17, 0
    %p94 = por %p92, %p93
    %p95 = scmp.ne.s32.totalorder %s83, %s84
    %p96 = scmp.eq.s32.totalorder %s18, 1
    %p97 = por %p95, %p96
    %p99 = scmp.ne.s32.totalorder %s84, %s98
    %p100 = scmp.eq.s32.totalorder %s18, 0
    %p101 = por %p99, %p100
    %s103 = sadd.s32 %s102, 1
    %p106 = scmp.eq.s32.totalorder %s12, 1
    %p107 = scmp.ne.s32.totalorder %s102, %s104
    %p108 = scmp.eq.s32.totalorder %s12, 0
    %p109 = por %p107, %p108
    %p110 = scmp.ne.s32.totalorder %s102, %s104
    %p111 = scmp.eq.s32.totalorder %s17, 1
    %p112 = por %p110, %p111
    %p113 = scmp.ne.s32.totalorder %s104, %s105
    %p114 = scmp.eq.s32.totalorder %s17, 0
    %p115 = por %p113, %p114
    %p116 = scmp.ne.s32.totalorder %s104, %s105
    %p117 = scmp.eq.s32.totalorder %s18, 1
    %p118 = por %p116, %p117
    %p120 = scmp.ne.s32.totalorder %s105, %s119
    %p121 = scmp.eq.s32.totalorder %s18, 0
    %p122 = por %p120, %p121
    %s123 = ssub.s32 %s19, %s31
    %s124 = ssub.s32 %s20, %s27
    %s125 = sor.u32 %s123, %s124
    %p126 = scmp.eq.s32.totalorder %s125, 0
    %s128 = sadd.s32 %s127, 1
    %s129 = scalar_select %p126, %s127, %s128
    %p132 = pneg %p126
    %p133 = scmp.eq.s32.totalorder %s12, 1
    %p134 = por %p132, %p133
    %p135 = scmp.ne.s32.totalorder %s127, %s130
    %p136 = scmp.eq.s32.totalorder %s12, 0
    %p137 = por %p135, %p136
    %p138 = scmp.ne.s32.totalorder %s127, %s130
    %p139 = scmp.eq.s32.totalorder %s17, 1
    %p140 = por %p138, %p139
    %p141 = scmp.ne.s32.totalorder %s130, %s131
    %p142 = scmp.eq.s32.totalorder %s17, 0
    %p143 = por %p141, %p142
    %p144 = scmp.ne.s32.totalorder %s130, %s131
    %p145 = scmp.eq.s32.totalorder %s18, 1
    %p146 = por %p144, %p145
    %p148 = scmp.ne.s32.totalorder %s131, %s147
    %p149 = scmp.eq.s32.totalorder %s18, 0
    %p150 = por %p148, %p149
    %s151 = ssub.s32 %s19, %s31
    %s152 = ssub.s32 %s20, %s27
    %s153 = sor.u32 %s151, %s152
    %p154 = scmp.eq.s32.totalorder %s153, 0
    %s156 = sadd.s32 %s155, 1
    %s157 = scalar_select %p154, %s155, %s156
    %p160 = pneg %p154
    %p161 = scmp.eq.s32.totalorder %s12, 1
    %p162 = por %p160, %p161
    %p163 = scmp.ne.s32.totalorder %s155, %s158
    %p164 = scmp.eq.s32.totalorder %s12, 0
    %p165 = por %p163, %p164
    %p166 = scmp.ne.s32.totalorder %s155, %s158
    %p167 = scmp.eq.s32.totalorder %s17, 1
    %p168 = por %p166, %p167
    %p169 = scmp.ne.s32.totalorder %s158, %s159
    %p170 = scmp.eq.s32.totalorder %s17, 0
    %p171 = por %p169, %p170
    %p172 = scmp.ne.s32.totalorder %s158, %s159
    %p173 = scmp.eq.s32.totalorder %s18, 1
    %p174 = por %p172, %p173
    %p176 = scmp.ne.s32.totalorder %s159, %s175
    %p177 = scmp.eq.s32.totalorder %s18, 0
    %p178 = por %p176, %p177
    %p179 = scmp.le.s32.totalorder 1, %s12
    %p180 = scmp.lt.s32.totalorder %s12, 3
    %p181 = pnand %p179, %p180
    %p182 = pneg %p181
    // Predicated region
    $region9: #{fused_head_level.1} parent=5 // pred_check
      _
    $region10: #{fused_head_level.1} parent=5 // pred_check_branch
      %184 = sbr.rel (%p181) target = $region12
    $region11: #{fused_head_level.1} parent=5 // pred_region
      %s185 = ssub.s32 %s12, 1
      // Predicated region
      $region13: #{fused_head_level.1} parent=11 // pred_check
        %p186 = pneg %p73
      $region14: #{fused_head_level.1} parent=11 // pred_check_branch
        %188 = sbr.rel (%p186) target = $region16
      $region15: #{fused_head_level.1} parent=11 // pred_region
        _
      $region16: #{fused_head_level.1} parent=11 // pred_fallthru
        _
      // Predicated region
      $region17: #{fused_head_level.1} parent=11 // pred_check
        %p189 = pneg %p94
      $region18: #{fused_head_level.1} parent=11 // pred_check_branch
        %191 = sbr.rel (%p189) target = $region20
      $region19: #{fused_head_level.1} parent=11 // pred_region
        _
      $region20: #{fused_head_level.1} parent=11 // pred_fallthru
        _
      // Predicated region
      $region21: #{fused_head_level.1} parent=11 // pred_check
        %p192 = pneg %p115
      $region22: #{fused_head_level.1} parent=11 // pred_check_branch
        %194 = sbr.rel (%p192) target = $region24
      $region23: #{fused_head_level.1} parent=11 // pred_region
        _
      $region24: #{fused_head_level.1} parent=11 // pred_fallthru
        _
    $region12: #{fused_head_level.1} parent=5 // pred_fallthru
      _
    %p195 = scmp.lt.s32.totalorder %s12, 2
    // Predicated region
    $region25: #{fused_head_level.1} parent=5 // pred_check
      %p196 = pneg %p195
    $region26: #{fused_head_level.1} parent=5 // pred_check_branch
      %198 = sbr.rel (%p196) target = $region28
    $region27: #{fused_head_level.1} parent=5 // pred_region
      // Predicated region
      $region29: #{fused_head_level.1} parent=27 // pred_check
        %p199 = pneg %p46
      $region30: #{fused_head_level.1} parent=27 // pred_check_branch
        %201 = sbr.rel (%p199) target = $region32
      $region31: #{fused_head_level.1} parent=27 // pred_region
        %p202 = scmp.lt.s32.totalorder %s19, 1
        %s203 = scalar_select %p202, %s19, 1
        %p204 = scmp.lt.s32.totalorder %s20, 0
        %s205 = scalar_select %p204, %s20, 0
        %s206 = smul.addr %s203, 2
        %s207 = sadd.s32 %s205, %s206
        %s208 = smul.addr %s207, 8
        %s209 = scalar_lea.vmem %s0, %s208
      $region32: #{fused_head_level.1} parent=27 // pred_fallthru
        _
    $region28: #{fused_head_level.1} parent=5 // pred_fallthru
      _
    %p210 = scmp.le.s32.totalorder 1, %s12
    %p211 = scmp.lt.s32.totalorder %s12, 3
    %p212 = pnand %p210, %p211
    %p213 = pneg %p212
    // Predicated region
    $region33: #{fused_head_level.1} parent=5 // pred_check
      _
    $region34: #{fused_head_level.1} parent=5 // pred_check_branch
      %215 = sbr.rel (%p212) target = $region36
    $region35: #{fused_head_level.1} parent=5 // pred_region
      %s216 = ssub.s32 %s12, 1
      %p217 = scmp.lt.s32.totalorder %s21, 1
      %s218 = scalar_select %p217, %s21, 1
      %p219 = scmp.lt.s32.totalorder %s22, 0
      %s220 = scalar_select %p219, %s22, 0
      %s221 = smul.addr %s218, 2
      %s222 = sadd.s32 %s220, %s221
      %s223 = smul.addr %s222, 8
      %s224 = scalar_lea.vmem %s0, %s223
      %p225 = pneg %p52
      %p226 = pneg %p49
      %p227 = pneg %p73
      %p228 = pneg %p70
      %p229 = pneg %p94
      %p230 = pneg %p91
      %p231 = pneg %p115
      %p232 = pneg %p112
      %p233 = pneg %p143
      %p234 = pneg %p140
      %p235 = scmp.lt.s32.totalorder %s21, 1
      %s236 = scalar_select %p235, %s21, 1
      %p237 = scmp.lt.s32.totalorder %s22, 0
      %s238 = scalar_select %p237, %s22, 0
      %s239 = smul.addr %s236, 2
      %s240 = sadd.s32 %s238, %s239
      %s241 = smul.addr %s240, 8
      %s242 = scalar_lea.vmem %s4, %s241
      %p243 = pneg %p171
      %p244 = pneg %p168
      %p245 = scmp.lt.s32.totalorder %s21, 1
      %s246 = scalar_select %p245, %s21, 1
      %p247 = scmp.lt.s32.totalorder %s22, 0
      %s248 = scalar_select %p247, %s22, 0
      %s249 = smul.addr %s246, 2
      %s250 = sadd.s32 %s248, %s249
      %s251 = smul.addr %s250, 4
      %s252 = scalar_lea.vmem %s5, %s251
      %p253 = scmp.lt.s32.totalorder %s21, 1
      %s254 = scalar_select %p253, %s21, 1
      %p255 = scmp.lt.s32.totalorder %s22, 0
      %s256 = scalar_select %p255, %s22, 0
      %s257 = smul.addr %s254, 2
      %s258 = sadd.s32 %s256, %s257
      %s259 = smul.addr %s258, 8
      %s260 = scalar_lea.vmem %s0, %s259
      %p261 = scmp.lt.s32.totalorder %s21, 1
      %s262 = scalar_select %p261, %s21, 1
      %p263 = scmp.lt.s32.totalorder %s22, 0
      %s264 = scalar_select %p263, %s22, 0
      %s265 = smul.addr %s262, 2
      %s266 = sadd.s32 %s264, %s265
      %s267 = smul.addr %s266, 8
      %s268 = scalar_lea.vmem %s4, %s267
      %p269 = scmp.lt.s32.totalorder %s21, 1
      %s270 = scalar_select %p269, %s21, 1
      %p271 = scmp.lt.s32.totalorder %s22, 0
      %s272 = scalar_select %p271, %s22, 0
      %s273 = smul.addr %s270, 2
      %s274 = sadd.s32 %s272, %s273
      %s275 = smul.addr %s274, 4
      %s276 = scalar_lea.vmem %s5, %s275
      %v278 = vld [vmem:[%s260] sm:$0xff]
      %v279 = vld [vmem:[%s260 + $0x8] sm:$0xff]
      %v280 = vpack.c.bf16 %v279, %v278
      %v281 = vld [vmem:[%s1] sm:$0xf]
      %v282 = vld [vmem:[%s1 + $0x4] sm:$0xf]
      %v283 = vld [vmem:[%s1 + $0x8] sm:$0xf]
      %v284 = vld [vmem:[%s2] sm:$0xff]
      %v285 = vld [vmem:[%s2 + $0x8] sm:$0xff]
      %v286 = vld [vmem:[%s2 + $0x10] sm:$0xff]
      %288 = vset.pattern.permute.xlu0 0
      %289 = vperm.xlu0 %288, %v284
      %v290 = vpop.permute.xlu0 %289
      %293 = vset.pattern.permute.xlu0 0
      %294 = vperm.xlu0 %293, %v285
      %v295 = vpop.permute.xlu0 %294
      %298 = vset.pattern.permute.xlu0 0
      %299 = vperm.xlu0 %298, %v286
      %v300 = vpop.permute.xlu0 %299
      %v305 = vunpack.c.l.b16 %v281
      %v306 = vunpack.c.l.b16 %v282
      %v307 = vunpack.c.l.b16 %v283
      %v308 = vpack.c.b16 %v306, %v305
      %v309 = vpack.c.b16 %v307, %v307
      %vm310 = vcmask 130048
      %v312 = vsel %vm310, %v308, 0
      %v315 = vsel %vm310, %v309, 0
      %317 = vmatpush.bf16.msra.mxu0 0
      %318 = vmatpush.bf16.msra.mxu0 0
      %319 = vmatpush.bf16.msra.mxu0 0
      %320 = vmatpush.bf16.msra.mxu0 0
      %321 = vmatpush.bf16.msra.mxu0 0
      %322 = vmatpush.bf16.msra.mxu0 0
      %323 = vmatpush.bf16.msra.mxu0 0
      %324 = vmatpush.bf16.msra.mxu0 %v280
      %325 = vmatmul.bf16.gmra.mxu0 %v312
      %v326 = vpop.f32.mrf.mxu0
      %v327 = vadd.f32 %v290, %v326
      %v328 = vpop.f32.mrf.mxu0
      %v329 = vadd.f32 %v295, %v328
      %330 = vmatmul.bf16.gmra.mxu0 %v315
      %v331 = vpop.f32.mrf.mxu0
      %v332 = vadd.f32 %v300, %v331
      %v333 = vpop.f32.mrf.mxu0
      %334 = vdwg.mxu0
      %v335 = vxor.u32 %v327, 2147483648
      %v336 = vxor.u32 %v329, 2147483648
      %v337 = vxor.u32 %v332, 2147483648
      %v338 = vmul.f32 %v335, 1.442695
      %v339 = vpow.pop %v338
      %v340 = vmul.f32 %v336, 1.442695
      %v341 = vpow.pop %v340
      %v342 = vmul.f32 %v337, 1.442695
      %v343 = vpow.pop %v342
      %v344 = vadd.f32 %v339, 1.0
      %v345 = vadd.f32 %v341, 1.0
      %v346 = vadd.f32 %v343, 1.0
      %v347 = vrcp.pop %v344
      %v348 = vmul.f32 %v344, %v347
      %v349 = vsub.f32 1.0, %v348
      %v350 = vmul.f32 %v347, %v349
      %v351 = vadd.f32 %v347, %v350
      %vm352 = vweird.f32 %v344
      %vm353 = vweird.f32 %v347
      %vm354 = vmor %vm352, %vm353
      %v355 = vsel %vm354, %v347, %v351
      %v356 = vand.u32 2147483647, %v344
      %vm357 = vcmp.eq.f32.partialorder %v356, 8.507059e+37
      %v358 = vand.u32 %v344, 2147483648
      %v359 = vor.u32 1.1754944e-38, %v358
      %v360 = vsel %vm357, %v359, %v355
      %v361 = vmul.f32 1.0, %v360
      %v362 = vrcp.pop %v345
      %v363 = vmul.f32 %v345, %v362
      %v364 = vsub.f32 1.0, %v363
      %v365 = vmul.f32 %v362, %v364
      %v366 = vadd.f32 %v362, %v365
      %vm367 = vweird.f32 %v345
      %vm368 = vweird.f32 %v362
      %vm369 = vmor %vm367, %vm368
      %v370 = vsel %vm369, %v362, %v366
      %v371 = vand.u32 2147483647, %v345
      %vm372 = vcmp.eq.f32.partialorder %v371, 8.507059e+37
      %v373 = vand.u32 %v345, 2147483648
      %v374 = vor.u32 1.1754944e-38, %v373
      %v375 = vsel %vm372, %v374, %v370
      %v376 = vmul.f32 1.0, %v375
      %v377 = vrcp.pop %v346
      %v378 = vmul.f32 %v346, %v377
      %v379 = vsub.f32 1.0, %v378
      %v380 = vmul.f32 %v377, %v379
      %v381 = vadd.f32 %v377, %v380
      %vm382 = vweird.f32 %v346
      %vm383 = vweird.f32 %v377
      %vm384 = vmor %vm382, %vm383
      %v385 = vsel %vm384, %v377, %v381
      %v386 = vand.u32 2147483647, %v346
      %vm387 = vcmp.eq.f32.partialorder %v386, 8.507059e+37
      %v388 = vand.u32 %v346, 2147483648
      %v389 = vor.u32 1.1754944e-38, %v388
      %v390 = vsel %vm387, %v389, %v385
      %v391 = vmul.f32 1.0, %v390
      %s392 = smul.u32 %s22, 128
      %v393 = vlaneseq
      %v394 = vand.u32 %v393, 127
      %v395 = vstv %s392
      %v396 = vadd.s32 %v395, %v394
      %v397 = vcvt.s32.f32 %v396
      %v398 = vadd.f32 %v397, 0.5
      %v399 = vmul.f32 %v398, 0.125
      %v400 = vfloor.f32 %v399
      %v401 = vmul.f32 %v400, 8.0
      %v402 = vsub.f32 %v397, %v401
      %vm403 = vcmask 1042432
      %v404 = vsel %vm403, %v402, %v400
      %v405 = vmul.f32 %v361, 2.0
      %v406 = vsub.f32 %v405, 0.5
      %v407 = vadd.f32 %v406, %v404
      %v408 = vmul.f32 %v407, 8.0
      %v409 = vld [vmem:[%s3] sm:$0x3f]
      %v410 = vmul.f32 %v361, %v361
      %v411 = vmul.f32 %v376, %v376
      %413 = vset.pattern.permute.xlu0 0
      %414 = vperm.xlu0 %413, %v409
      %v415 = vpop.permute.xlu0 %414
      %vm419 = vcmask 1041408
      %v420 = vrot.slane %v410, 6
      %v421 = vrot.slane %v411, 6
      %v422 = vsel %vm419, %v420, %v421
      %v424 = vmul.f32 %v415, %v422
      %v425 = vsub.f32 %v408, %v424
      %v426 = vadd.f32 %v408, %v424
      %v428 = vrot.slane %v426, 2
      %vm430 = vcmask 1045504
      %v431 = vsel %vm430, %v425, %v428
      %432 = vst [vmem:[%s268] sm:$0xff] %v431
      %433 = vst [vmem:[%s268 + $0x8] sm:$0xf] %v428
      %v434 = vpack.c.bf16 %v376, %v376
      %v435 = vpack.c.bf16 %v391, %v391
      %vm438 = vcmask 1041408
      %vm439 = vcmask 1045508
      %vm440 = vmor %vm438, %vm439
      %v441 = vrot.slane %v434, 6
      %v442 = vrot.slane %v441, 4
      %v443 = vrot.slane %v435, 6
      %v444 = vsel %vm440, %v442, %v443
      %v445 = vrot.slane %v443, 4
      %448 = vst [vmem:[%s276] sm:$0xf] %v444
      %449 = vst [vmem:[%s276 + $0x4] sm:$0x3] %v445
      %p450 = scmp.lt.s32.totalorder %s21, 1
      %s451 = scalar_select %p450, %s21, 1
      %p452 = scmp.lt.s32.totalorder %s22, 0
      %s453 = scalar_select %p452, %s22, 0
      %s454 = smul.addr %s451, 2
      %s455 = sadd.s32 %s453, %s454
      %s456 = smul.addr %s455, 8
      %s457 = scalar_lea.vmem %s4, %s456
      %p458 = scmp.lt.s32.totalorder %s21, 1
      %s459 = scalar_select %p458, %s21, 1
      %p460 = scmp.lt.s32.totalorder %s22, 0
      %s461 = scalar_select %p460, %s22, 0
      %s462 = smul.addr %s459, 2
      %s463 = sadd.s32 %s461, %s462
      %s464 = smul.addr %s463, 4
      %s465 = scalar_lea.vmem %s5, %s464
      // Predicated region
      $region37: #{fused_head_level.1} parent=35 // pred_check
        %p466 = pneg %p140
      $region38: #{fused_head_level.1} parent=35 // pred_check_branch
        %468 = sbr.rel (%p466) target = $region40
      $region39: #{fused_head_level.1} parent=35 // pred_region
        _
      $region40: #{fused_head_level.1} parent=35 // pred_fallthru
        _
      // Predicated region
      $region41: #{fused_head_level.1} parent=35 // pred_check
        %p469 = pneg %p168
      $region42: #{fused_head_level.1} parent=35 // pred_check_branch
        %471 = sbr.rel (%p469) target = $region44
      $region43: #{fused_head_level.1} parent=35 // pred_region
        _
      $region44: #{fused_head_level.1} parent=35 // pred_fallthru
        _
    $region36: #{fused_head_level.1} parent=5 // pred_fallthru
      _
    %p472 = scmp.le.s32.totalorder 2, %s12
    // Predicated region
    $region45: #{fused_head_level.1} parent=5 // pred_check
      %p473 = pneg %p472
    $region46: #{fused_head_level.1} parent=5 // pred_check_branch
      %475 = sbr.rel (%p473) target = $region48
    $region47: #{fused_head_level.1} parent=5 // pred_region
      %s476 = ssub.s32 %s12, 2
      // Predicated region
      $region49: #{fused_head_level.1} parent=47 // pred_check
        %p477 = pneg %p146
      $region50: #{fused_head_level.1} parent=47 // pred_check_branch
        %479 = sbr.rel (%p477) target = $region52
      $region51: #{fused_head_level.1} parent=47 // pred_region
        %p480 = scmp.lt.s32.totalorder %s23, 1
        %s481 = scalar_select %p480, %s23, 1
        %p482 = scmp.lt.s32.totalorder %s24, 0
        %s483 = scalar_select %p482, %s24, 0
        %s484 = smul.addr %s481, 2
        %s485 = sadd.s32 %s483, %s484
        %s486 = smul.addr %s485, 8
        %s487 = scalar_lea.vmem %s4, %s486
      $region52: #{fused_head_level.1} parent=47 // pred_fallthru
        _
      // Predicated region
      $region53: #{fused_head_level.1} parent=47 // pred_check
        %p488 = pneg %p174
      $region54: #{fused_head_level.1} parent=47 // pred_check_branch
        %490 = sbr.rel (%p488) target = $region56
      $region55: #{fused_head_level.1} parent=47 // pred_region
        %p491 = scmp.lt.s32.totalorder %s23, 1
        %s492 = scalar_select %p491, %s23, 1
        %p493 = scmp.lt.s32.totalorder %s24, 0
        %s494 = scalar_select %p493, %s24, 0
        %s495 = smul.addr %s492, 2
        %s496 = sadd.s32 %s494, %s495
        %s497 = smul.addr %s496, 4
        %s498 = scalar_lea.vmem %s5, %s497
      $region56: #{fused_head_level.1} parent=47 // pred_fallthru
        _
    $region48: #{fused_head_level.1} parent=5 // pred_fallthru
      _
  $region6: #{fused_head_level.1} parent=0 // loop_footer
    %s16 = sadd.s32 1, %s12
  $region7: #{fused_head_level.1} parent=0 // loop_footer_branch
    %11 = sbr.rel target = $region3
  $region8: #{fused_head_level.1} parent=0 // loop_exit
    _

</llo_original>
